<compile_context>
chip_gen: v7x
topology: tpu7x:2x2x1
jax: 0.10.0
libtpu: 0.0.40
codegen_flags: <defaults>
</compile_context>

<pallas_src>
import jax
import jax.numpy as jnp
from jax.experimental import pallas as pl
from jax.experimental.pallas import tpu as pltpu

_LANE = 128
_TARGET_BLOCK_BYTES = 4 * 1024 * 1024    # per x block; x+out double-buffered = 16 MiB
_VMEM_LIMIT_BYTES = 48 * 1024 * 1024     # < v7x 64 MiB physical; fine on v5e/v6e


def _cdiv(a, b):
    return -(-a // b)


def _round_up(a, b):
    return _cdiv(a, b) * b


def _drop_path_kernel(scale_ref, x_ref, o_ref):
    # scale_ref: VMEM (TB, 1) per-sample mask/keep_prob in x.dtype
    # x_ref/o_ref: VMEM (TB, TN) tiles of the flattened activations
    o_ref[...] = x_ref[...] * scale_ref[...]


def _choose_tiles(B, N, itemsize):
    """Pick (TB, TN): ~_TARGET_BLOCK_BYTES per x block, lane/sublane aligned."""
    sub = {1: 32, 2: 16, 4: 8}.get(itemsize, 8)   # packed-sublane multiple

    # Lane (last) dim tile: full N when it fits the budget (legal even when
    # N % 128 != 0), otherwise a multiple of 128 (Pallas masks the ragged
    # last block -> no host-side padding needed).
    max_lanes = max(_LANE, (_TARGET_BLOCK_BYTES // (sub * itemsize)) // _LANE * _LANE)
    tn = N if N <= max_lanes else max_lanes

    # Sublane (batch) dim tile: whole batch if small (full dim is legal),
    # otherwise a multiple of `sub` sized to keep the block near the target.
    if B <= sub:
        tb = B
    else:
        budget_rows = max(sub, (_TARGET_BLOCK_BYTES // (max(tn, 1) * itemsize)) // sub * sub)
        tb = min((B // sub) * sub, budget_rows)

    # v7x has 2 TensorCores: if the grid would collapse to (1, 1), split one
    # "parallel" axis so both cores get work (harmless on single-TC v5e/v6e).
    if _cdiv(B, tb) == 1 and _cdiv(N, tn) == 1:
        if N >= 2 * _LANE:
            tn = min(tn, _round_up(_cdiv(N, 2), _LANE))
        elif B >= 2 * sub:
            tb = min(tb, _round_up(_cdiv(B, 2), sub))
    return tb, tn


def drop_path(x, drop_prob, training, key):
    """Pallas DropPath. x: (B, ...); per-sample mask broadcasts over the rest.

    drop_prob / training must be static Python values (early-exit is a Python
    branch, matching the PyTorch module's behaviour).
    """
    if drop_prob is None or drop_prob == 0.0 or not training:
        return x

    orig_shape = x.shape
    B = int(orig_shape[0])
    N = 1
    for d in orig_shape[1:]:
        N *= int(d)

    keep_prob = 1.0 - drop_prob
    # Per-sample binary mask, pre-divided by keep_prob (B scalars of glue).
    u = jax.random.uniform(key, (B,), dtype=jnp.float32)
    scale = (jnp.floor(keep_prob + u) / keep_prob).astype(x.dtype)
    scale2d = scale.reshape(B, 1)

    # Contiguous row-major reshape: metadata only, no HBM pass.
    xf = x.reshape(B, N)

    itemsize = jnp.dtype(x.dtype).itemsize
    tb, tn = _choose_tiles(B, N, itemsize)
    grid = (_cdiv(B, tb), _cdiv(N, tn))

    out = pl.pallas_call(
        _drop_path_kernel,
        out_shape=jax.ShapeDtypeStruct((B, N), x.dtype),
        grid=grid,
        in_specs=[
            pl.BlockSpec((tb, 1), lambda i, j: (i, 0)),    # per-sample scale (resident over j)
            pl.BlockSpec((tb, tn), lambda i, j: (i, j)),   # activations
        ],
        out_specs=pl.BlockSpec((tb, tn), lambda i, j: (i, j)),
        compiler_params=pltpu.CompilerParams(
            dimension_semantics=("parallel", "parallel"),
            vmem_limit_bytes=_VMEM_LIMIT_BYTES),
        cost_estimate=pl.CostEstimate(
            flops=B * N,
            transcendentals=0,
            bytes_accessed=2 * B * N * itemsize + B * itemsize),
    )(scale2d, xf)

    return out.reshape(orig_shape)


class DropPath:
    """Mirror of the PyTorch module (no parameters)."""

    def __init__(self, drop_prob=None):
        self.drop_prob = drop_prob
        self.training = True

    def __call__(self, x, key):
        return drop_path(x, self.drop_prob, self.training, key)


if __name__ == "__main__":
    key = jax.random.PRNGKey(0)
    kx, kmask, kx2, kmask2, kx3, kmask3, kx4, kmask4 = jax.random.split(key, 8)

    drop_prob = 0.25
    keep_prob = 1.0 - drop_prob

    # --- (B, S, H) case matching the RetNet usage -------------------------
    B, S, H = 2, 8, 32
    x = jax.random.normal(kx, (B, S, H), dtype=jnp.float32)
    module = DropPath(drop_prob=drop_prob)

    out_train = jax.block_until_ready(module(x, kmask))
    u = jax.random.uniform(kmask, (B,), dtype=jnp.float32)
    scale_ref = jnp.floor(keep_prob + u) / keep_prob
    ref_train = x * scale_ref[:, None, None]
    assert jnp.allclose(out_train, ref_train, atol=1e-6, rtol=1e-6)

    # --- feature count not a multiple of 128 (no padding, TN == N) --------
    B2, S2, H2 = 3, 5, 7
    x2 = jax.random.normal(kx2, (B2, S2, H2), dtype=jnp.float32)
    out2 = jax.block_until_ready(drop_path(x2, drop_prob, True, kmask2))
    u2 = jax.random.uniform(kmask2, (B2,), dtype=jnp.float32)
    scale2 = jnp.floor(keep_prob + u2) / keep_prob
    ref2 = x2 * scale2[:, None, None]
    assert jnp.allclose(out2, ref2, atol=1e-6, rtol=1e-6)

    # --- batch not a multiple of the sublane tile (ragged batch block) ----
    B3, S3, H3 = 10, 4, 16
    x3 = jax.random.normal(kx3, (B3, S3, H3), dtype=jnp.float32)
    out3 = jax.block_until_ready(drop_path(x3, drop_prob, True, kmask3))
    u3 = jax.random.uniform(kmask3, (B3,), dtype=jnp.float32)
    scale3 = jnp.floor(keep_prob + u3) / keep_prob
    ref3 = x3 * scale3[:, None, None]
    assert jnp.allclose(out3, ref3, atol=1e-6, rtol=1e-6)

    # --- bf16 inputs (scale applied in x.dtype, timm-style) ---------------
    x4 = jax.random.normal(kx4, (B, S, H), dtype=jnp.bfloat16)
    out4 = jax.block_until_ready(drop_path(x4, drop_prob, True, kmask4))
    u4 = jax.random.uniform(kmask4, (B,), dtype=jnp.float32)
    scale4 = (jnp.floor(keep_prob + u4) / keep_prob).astype(jnp.bfloat16)
    ref4 = x4 * scale4[:, None, None]
    assert jnp.allclose(out4.astype(jnp.float32), ref4.astype(jnp.float32),
                        atol=1e-2, rtol=1e-2)

    # --- eval mode: identity ----------------------------------------------
    module.training = False
    out_eval = jax.block_until_ready(module(x, kmask))
    assert jnp.allclose(out_eval, x)

    print("KERNEL_OK")
</pallas_src>

<mosaic_0001>
module attributes {stable_mosaic.version = 11 : i64} {
  func.func @_drop_path_kernel(%arg0: i32, %arg1: i32, %arg2: memref<2x1xf32, #tpu.memory_space<vmem>>, %arg3: memref<2x128xf32, #tpu.memory_space<vmem>>, %arg4: memref<2x128xf32, #tpu.memory_space<vmem>>) attributes {dimension_semantics = [#tpu.dimension_semantics<parallel>, #tpu.dimension_semantics<parallel>], iteration_bounds = array<i64: 1, 2>, scalar_prefetch = 0 : i64, scratch_operands = 0 : i64, tpu.core_type = #tpu.core_type<tc>, window_params = [{transform_indices = @transform_0, window_bounds = array<i64: 2, 1>}, {transform_indices = @transform_1, window_bounds = array<i64: 2, 128>}, {transform_indices = @transform_2, window_bounds = array<i64: 2, 128>}]} {
    %c0 = arith.constant 0 : index
    %c0_0 = arith.constant 0 : index
    %0 = vector.load %arg3[%c0, %c0_0] : memref<2x128xf32, #tpu.memory_space<vmem>>, vector<2x128xf32>
    %c0_1 = arith.constant 0 : index
    %c0_2 = arith.constant 0 : index
    %1 = vector.load %arg2[%c0_1, %c0_2] : memref<2x1xf32, #tpu.memory_space<vmem>>, vector<2x1xf32>
    %2 = vector.broadcast %1 : vector<2x1xf32> to vector<2x128xf32>
    %3 = arith.mulf %0, %2 : vector<2x128xf32>
    %c0_3 = arith.constant 0 : index
    %c0_4 = arith.constant 0 : index
    %4 = vector.load %arg4[%c0_3, %c0_4] : memref<2x128xf32, #tpu.memory_space<vmem>>, vector<2x128xf32>
    tpu.vector_store %arg4[%c0_3, %c0_4], %3 {strides = array<i32>} : memref<2x128xf32, #tpu.memory_space<vmem>>, vector<2x128xf32>,
    return
  }
  func.func @transform_0(%arg0: i32, %arg1: i32) -> (i32, i32) {
    %c0_i32 = arith.constant 0 : i32
    %c0_i32_0 = arith.constant 0 : i32
    return %arg0, %c0_i32 : i32, i32
  }
  func.func @transform_1(%arg0: i32, %arg1: i32) -> (i32, i32) {
    %c0_i32 = arith.constant 0 : i32
    return %arg0, %arg1 : i32, i32
  }
  func.func @transform_2(%arg0: i32, %arg1: i32) -> (i32, i32) {
    %c0_i32 = arith.constant 0 : i32
    return %arg0, %arg1 : i32, i32
  }
}

</mosaic_0001>

<llo_original>
// kernel: tpu_custom_call.1
$region0: #{tpu_custom_call.1}
  #allocation0 [shape = 'u32[]', space=smem, size = 0x4, offset = 0x4, fixed_abs, tag = 'smem constant byte address 0x4 - core index']
  #allocation1 [shape = 'u32[144,128]{1,0:T(1,128)}', space=vmem, size = 0x12000, scoped, tag = 'internal scratch']
  %s0 = inlined_call_operand.vmem [shape: f32[2,1], index: 0, kind: input, shape index: {}]
  %s1 = inlined_call_operand.vmem [shape: f32[2,256], index: 1, kind: input, shape index: {}]
  %s2 = inlined_call_operand.hbm [shape: f32[2,256], index: 2, kind: output, shape index: {}]
  %s3 = sld [smem:[#allocation0]]
  $region41: #{tpu_custom_call.1} parent=0
    _
  %s5 = ssub.s32 1, %s3
  %s6 = scalar_select 0, %s5, %s3
  $region1: #{tpu_custom_call.1} parent=0
    #allocation2 [shape = 'u8[2048]{0}', space=vmem, size = 0x800, scoped, tag = 'output window, operand 0']
    #allocation3 [shape = 's32[2]{0}', space=sflag, size = 0x8, scoped, tag = 'scoped memory for tpu_custom_call.1']
    %7 = vsyncpa [#allocation3], 0
    %s8 = scalar_lea.sflag [#allocation3], 1
    %9 = vsyncpa %s8, 0
    loop: start=0, step=1, limit=4
    $region2: #{tpu_custom_call.1} parent=1 // loop_pre_header
      _
    $region3: #{tpu_custom_call.1} parent=1 // loop_header
      %s11 = sphi 0, %s15
      %p12 = scmp.ge.s32.totalorder %s11, 4
      %s18 = sphi 0, %s30
      %s19 = sphi 0, %s26
      %s20 = sphi 0, %s18
      %s21 = sphi 0, %s19
      %s22 = sphi 0, %s20
      %s23 = sphi 0, %s21
      %s33 = sphi 0, %s35
      %s36 = sphi 0, %s33
      %s37 = sphi 0, %s36
      %s53 = sphi 0, %s37
      %s61 = sphi 0, %s63
      %s64 = sphi 0, %s61
      %s65 = sphi 0, %s64
      %s81 = sphi 0, %s65
      %s89 = sphi 0, %s91
      %s92 = sphi 0, %s89
      %s93 = sphi 0, %s92
      %s109 = sphi 0, %s93
    $region4: #{tpu_custom_call.1} parent=1 // loop_header_branch
      %14 = sbr.rel (%p12) target = $region8
    $region5: #{tpu_custom_call.1} parent=1 // loop_body
      %s16 = ssub.s32 %s11, 1
      %s17 = ssub.s32 %s11, 2
      %s24 = sadd.s32 1, %s19
      %p25 = scmp.ge.s32.totalorder %s24, 2
      %s26 = scalar_select %p25, 0, %s24
      %s27 = sadd.s32 1, %s18
      %s28 = scalar_select %p25, %s27, %s18
      %p29 = scmp.ge.s32.totalorder %s28, 1
      %s30 = scalar_select %p29, 0, %s28
      %s31 = ssub.s32 %s18, %s30
      %p32 = scmp.eq.s32.totalorder %s31, 0
      %s34 = sadd.s32 %s33, 1
      %s35 = scalar_select %p32, %s33, %s34
      %p38 = pneg %p32
      %p39 = scmp.eq.s32.totalorder %s11, 1
      %p40 = por %p38, %p39
      %p41 = scmp.ne.s32.totalorder %s33, %s36
      %p42 = scmp.eq.s32.totalorder %s11, 0
      %p43 = por %p41, %p42
      %p44 = scmp.ne.s32.totalorder %s33, %s36
      %p45 = scmp.eq.s32.totalorder %s16, 1
      %p46 = por %p44, %p45
      %p47 = scmp.ne.s32.totalorder %s36, %s37
      %p48 = scmp.eq.s32.totalorder %s16, 0
      %p49 = por %p47, %p48
      %p50 = scmp.ne.s32.totalorder %s36, %s37
      %p51 = scmp.eq.s32.totalorder %s17, 1
      %p52 = por %p50, %p51
      %p54 = scmp.ne.s32.totalorder %s37, %s53
      %p55 = scmp.eq.s32.totalorder %s17, 0
      %p56 = por %p54, %p55
      %s57 = ssub.s32 %s18, %s30
      %s58 = ssub.s32 %s19, %s26
      %s59 = sor.u32 %s57, %s58
      %p60 = scmp.eq.s32.totalorder %s59, 0
      %s62 = sadd.s32 %s61, 1
      %s63 = scalar_select %p60, %s61, %s62
      %p66 = pneg %p60
      %p67 = scmp.eq.s32.totalorder %s11, 1
      %p68 = por %p66, %p67
      %p69 = scmp.ne.s32.totalorder %s61, %s64
      %p70 = scmp.eq.s32.totalorder %s11, 0
      %p71 = por %p69, %p70
      %p72 = scmp.ne.s32.totalorder %s61, %s64
      %p73 = scmp.eq.s32.totalorder %s16, 1
      %p74 = por %p72, %p73
      %p75 = scmp.ne.s32.totalorder %s64, %s65
      %p76 = scmp.eq.s32.totalorder %s16, 0
      %p77 = por %p75, %p76
      %p78 = scmp.ne.s32.totalorder %s64, %s65
      %p79 = scmp.eq.s32.totalorder %s17, 1
      %p80 = por %p78, %p79
      %p82 = scmp.ne.s32.totalorder %s65, %s81
      %p83 = scmp.eq.s32.totalorder %s17, 0
      %p84 = por %p82, %p83
      %s85 = ssub.s32 %s18, %s30
      %s86 = ssub.s32 %s19, %s26
      %s87 = sor.u32 %s85, %s86
      %p88 = scmp.eq.s32.totalorder %s87, 0
      %s90 = sadd.s32 %s89, 1
      %s91 = scalar_select %p88, %s89, %s90
      %p94 = pneg %p88
      %p95 = scmp.eq.s32.totalorder %s11, 1
      %p96 = por %p94, %p95
      %p97 = scmp.ne.s32.totalorder %s89, %s92
      %p98 = scmp.eq.s32.totalorder %s11, 0
      %p99 = por %p97, %p98
      %p100 = scmp.ne.s32.totalorder %s89, %s92
      %p101 = scmp.eq.s32.totalorder %s16, 1
      %p102 = por %p100, %p101
      %p103 = scmp.ne.s32.totalorder %s92, %s93
      %p104 = scmp.eq.s32.totalorder %s16, 0
      %p105 = por %p103, %p104
      %p106 = scmp.ne.s32.totalorder %s92, %s93
      %p107 = scmp.eq.s32.totalorder %s17, 1
      %p108 = por %p106, %p107
      %p110 = scmp.ne.s32.totalorder %s93, %s109
      %p111 = scmp.eq.s32.totalorder %s17, 0
      %p112 = por %p110, %p111
      %p113 = scmp.le.s32.totalorder 1, %s11
      %p114 = scmp.lt.s32.totalorder %s11, 3
      %p115 = pnand %p113, %p114
      %p116 = pneg %p115
      // Predicated region
      $region9: #{tpu_custom_call.1} parent=5 // pred_check
        _
      $region10: #{tpu_custom_call.1} parent=5 // pred_check_branch
        %118 = sbr.rel (%p115) target = $region12
      $region11: #{tpu_custom_call.1} parent=5 // pred_region
        %s119 = ssub.s32 %s11, 1
        // Predicated region
        $region13: #{tpu_custom_call.1} parent=11 // pred_check
          %p120 = pneg %p49
        $region14: #{tpu_custom_call.1} parent=11 // pred_check_branch
          %122 = sbr.rel (%p120) target = $region16
        $region15: #{tpu_custom_call.1} parent=11 // pred_region
          %p123 = scmp.lt.s32.totalorder %s20, 0
          %s124 = scalar_select %p123, %s20, 0
          %s125 = smul.addr %s124, 2
          %s126 = scalar_lea.vmem %s0, %s125
        $region16: #{tpu_custom_call.1} parent=11 // pred_fallthru
          _
      $region12: #{tpu_custom_call.1} parent=5 // pred_fallthru
        _
      %p127 = scmp.lt.s32.totalorder %s11, 2
      // Predicated region
      $region17: #{tpu_custom_call.1} parent=5 // pred_check
        %p128 = pneg %p127
      $region18: #{tpu_custom_call.1} parent=5 // pred_check_branch
        %130 = sbr.rel (%p128) target = $region20
      $region19: #{tpu_custom_call.1} parent=5 // pred_region
        // Predicated region
        $region21: #{tpu_custom_call.1} parent=19 // pred_check
          %p131 = pneg %p71
        $region22: #{tpu_custom_call.1} parent=19 // pred_check_branch
          %133 = sbr.rel (%p131) target = $region24
        $region23: #{tpu_custom_call.1} parent=19 // pred_region
          %p134 = scmp.lt.s32.totalorder %s18, 0
          %s135 = scalar_select %p134, %s18, 0
          %p136 = scmp.lt.s32.totalorder %s19, 1
          %s137 = scalar_select %p136, %s19, 1
          %s138 = smul.addr %s135, 2
          %s139 = sadd.s32 %s137, %s138
          %s140 = smul.addr %s139, 2
          %s141 = scalar_lea.vmem %s1, %s140
        $region24: #{tpu_custom_call.1} parent=19 // pred_fallthru
          _
      $region20: #{tpu_custom_call.1} parent=5 // pred_fallthru
        _
      %p142 = scmp.le.s32.totalorder 1, %s11
      %p143 = scmp.lt.s32.totalorder %s11, 3
      %p144 = pnand %p142, %p143
      %p145 = pneg %p144
      // Predicated region
      $region25: #{tpu_custom_call.1} parent=5 // pred_check
        _
      $region26: #{tpu_custom_call.1} parent=5 // pred_check_branch
        %147 = sbr.rel (%p144) target = $region28
      $region27: #{tpu_custom_call.1} parent=5 // pred_region
        %s148 = ssub.s32 %s11, 1
        %p149 = scmp.lt.s32.totalorder %s20, 0
        %s150 = scalar_select %p149, %s20, 0
        %s151 = smul.addr %s150, 2
        %s152 = scalar_lea.vmem %s0, %s151
        %p153 = pneg %p49
        %p154 = pneg %p46
        %p155 = scmp.lt.s32.totalorder %s20, 0
        %s156 = scalar_select %p155, %s20, 0
        %p157 = scmp.lt.s32.totalorder %s21, 1
        %s158 = scalar_select %p157, %s21, 1
        %s159 = smul.addr %s156, 2
        %s160 = sadd.s32 %s158, %s159
        %s161 = smul.addr %s160, 2
        %s162 = scalar_lea.vmem %s1, %s161
        %p163 = pneg %p77
        %p164 = pneg %p74
        %p165 = pneg %p105
        %p166 = pneg %p102
        %s167 = sand.u32 %s92, 1
        %s168 = scalar_lea.sflag [#allocation3], %s167
        %s169 = sand.u32 %s92, 1
        %s170 = smul.addr %s169, 2
        %s171 = scalar_lea.vmem [#allocation2], %s170
        %p172 = scmp.lt.s32.totalorder %s20, 0
        %s173 = scalar_select %p172, %s20, 0
        %s174 = smul.addr %s173, 2
        %s175 = scalar_lea.vmem %s0, %s174
        %p176 = scmp.lt.s32.totalorder %s20, 0
        %s177 = scalar_select %p176, %s20, 0
        %p178 = scmp.lt.s32.totalorder %s21, 1
        %s179 = scalar_select %p178, %s21, 1
        %s180 = smul.addr %s177, 2
        %s181 = sadd.s32 %s179, %s180
        %s182 = smul.addr %s181, 2
        %s183 = scalar_lea.vmem %s1, %s182
        %v184 = vld [vmem:[%s183] sm:$0x3]
        %v185 = vld [vmem:[%s175] sm:$0x3]
        %187 = vset.pattern.permute.xlu0 0
        %188 = vperm.xlu0 %187, %v185
        %v189 = vpop.permute.xlu0 %188
        %v191 = vmul.f32 %v184, %v189
        %192 = vst [vmem:[%s171] sm:$0x3] %v191
        %s193 = sand.u32 %s92, 1
        %s194 = scalar_lea.sflag [#allocation3], %s193
        %s195 = sand.u32 %s92, 1
        %s196 = smul.addr %s195, 2
        %s197 = scalar_lea.vmem [#allocation2], %s196
        // Predicated region
        $region29: #{tpu_custom_call.1} parent=27 // pred_check
          %p198 = pneg %p102
        $region30: #{tpu_custom_call.1} parent=27 // pred_check_branch
          %200 = sbr.rel (%p198) target = $region32
        $region31: #{tpu_custom_call.1} parent=27 // pred_region
          %s202 = ssub.s32 32, 32
          %203 = vsyncadd %s194, %s202
          %s204 = smul.addr %s20, 2
          %s205 = sadd.s32 %s21, %s204
          %s206 = smul.addr %s205, 32
          %s207 = scalar_lea.hbm %s2, %s206
          %s209 = sshll.u32 %s197, 4
          %s210 = int_to_ptr.vmem [resolvable:$true] %s209
          %212 = dma.vmem_to_hbm [thread:$0]  %s210, 32, %s207, %s194
        $region32: #{tpu_custom_call.1} parent=27 // pred_fallthru
          _
      $region28: #{tpu_custom_call.1} parent=5 // pred_fallthru
        _
      %p213 = scmp.le.s32.totalorder 2, %s11
      // Predicated region
      $region33: #{tpu_custom_call.1} parent=5 // pred_check
        %p214 = pneg %p213
      $region34: #{tpu_custom_call.1} parent=5 // pred_check_branch
        %216 = sbr.rel (%p214) target = $region36
      $region35: #{tpu_custom_call.1} parent=5 // pred_region
        %s217 = ssub.s32 %s11, 2
        // Predicated region
        $region37: #{tpu_custom_call.1} parent=35 // pred_check
          %p218 = pneg %p108
        $region38: #{tpu_custom_call.1} parent=35 // pred_check_branch
          %220 = sbr.rel (%p218) target = $region40
        $region39: #{tpu_custom_call.1} parent=35 // pred_region
          %s221 = sand.u32 %s93, 1
          %s222 = scalar_lea.sflag [#allocation3], %s221
          %s223 = sand.u32 %s93, 1
          %s224 = smul.addr %s223, 2
          %s225 = scalar_lea.vmem [#allocation2], %s224
          %226 = dma.done %s222, 32
        $region40: #{tpu_custom_call.1} parent=35 // pred_fallthru
          _
      $region36: #{tpu_custom_call.1} parent=5 // pred_fallthru
        _
    $region6: #{tpu_custom_call.1} parent=1 // loop_footer
      %s15 = sadd.s32 1, %s11
    $region7: #{tpu_custom_call.1} parent=1 // loop_footer_branch
      %10 = sbr.rel target = $region3
    $region8: #{tpu_custom_call.1} parent=1 // loop_exit
      _
    %227 = vsyncpa [#allocation3], 1
    %s228 = scalar_lea.sflag [#allocation3], 1
    %229 = vsyncpa %s228, 1

</llo_original>
